<compile_context>
chip_gen: v6e
topology: v6e:2x2x1
jax: 0.10.0
libtpu: 0.0.40
codegen_flags: <defaults>
</compile_context>

<pallas_src>
import jax
import jax.numpy as jnp
from jax.experimental import pallas as pl
from jax.experimental.pallas import tpu as pltpu

_NEG = -1e30  # finite "minus infinity" for masked softmax slots (avoids NaN)


def _round_up(x, m):
    return (x + m - 1) // m * m


def _onto_attn_kernel(cnt_ref, l_ref, a_ref, wl_ref, wa_ref, bw_ref, out_ref):
    """One grid step == TILE_N codes.

    cnt_ref : (TILE_N, 1) int32    valid-ancestor count per code
    l_ref   : (TILE_N, D) bf16     leaf embedding (one per code)
    a_ref   : (A, TILE_N, D) bf16  ancestor embeddings, ancestor-slot major
    wl_ref  : (D, K) bf16          attn weight, leaf half
    wa_ref  : (D, K) bf16          attn weight, ancestor half
    bw_ref  : (2, K) f32           row 0 = attn bias, row 1 = attnCombine weight
    out_ref : (TILE_N, D) f32
    """
    A, tile_n, D = a_ref.shape
    K = wl_ref.shape[1]

    b = bw_ref[0:1, :]                                  # (1, K) f32
    wc = bw_ref[1:2, :].reshape(1, 1, K)                # (1, 1, K) f32

    # Leaf projection computed ONCE per tile (attn bias folded in here).
    lproj = jnp.dot(l_ref[...], wl_ref[...],
                    preferred_element_type=jnp.float32) + b            # (TILE_N, K)

    # ONE batched MXU matmul over all ancestor slots (leading-dim merge).
    a_flat = a_ref[...].reshape(A * tile_n, D)
    aproj = jnp.dot(a_flat, wa_ref[...],
                    preferred_element_type=jnp.float32)                # (A*TILE_N, K)
    h = jnp.tanh(aproj.reshape(A, tile_n, K) + lproj[None, :, :])      # (A, TILE_N, K)

    # attnCombine as a lane reduction (its bias cancels in the softmax), then
    # one small transpose so the scores form a lane-dense (TILE_N, A) tile.
    s = jnp.sum(h * wc, axis=-1)                                       # (A, TILE_N)
    s = s.T                                                            # (TILE_N, A)

    # Mask padded ancestor slots, softmax along the lane (ancestor) axis.
    slot = jax.lax.broadcasted_iota(jnp.int32, (tile_n, A), 1)
    s = jnp.where(slot < cnt_ref[...], s, _NEG)
    m = jnp.max(s, axis=-1, keepdims=True)                             # (TILE_N, 1)
    e = jnp.exp(s - m)                                                 # (TILE_N, A)
    denom = jnp.sum(e, axis=-1, keepdims=True)                         # (TILE_N, 1)
    w = e * pl.reciprocal(denom, approx=True)                          # (TILE_N, A)

    # Weighted sum of ancestor embeddings; f32 accumulation, bf16 loads.
    acc = a_ref[0].astype(jnp.float32) * w[:, 0:1]
    for j in range(1, A):
        acc = acc + a_ref[j].astype(jnp.float32) * w[:, j:j + 1]
    out_ref[...] = acc.astype(out_ref.dtype)


def onto_attn_batched(cnt, l_emb, a_emb, wl, wa, bw, *, tile_n):
    """(N,D) leaves + (A,N,D) ancestors (N a multiple of tile_n) -> (N,D)."""
    A, N, D = a_emb.shape
    K = wl.shape[1]
    grid = (N // tile_n,)

    # Explicit VMEM budget: double-buffered inputs + double-buffered output
    # + resident weights + headroom (default scoped limit is 16/32 MiB).
    in_bytes = 2 * (A * tile_n * D * 2 + tile_n * D * 2 + tile_n * 4)
    out_bytes = 2 * tile_n * D * 4
    w_bytes = 2 * (D * K * 2) + 2 * K * 4
    vmem_limit = int(min(64 << 20,
                         max(in_bytes + out_bytes + w_bytes + (8 << 20), 16 << 20)))

    return pl.pallas_call(
        _onto_attn_kernel,
        grid=grid,
        in_specs=[
            pl.BlockSpec((tile_n, 1), lambda i: (i, 0)),        # cnt
            pl.BlockSpec((tile_n, D), lambda i: (i, 0)),        # leaves (N, D)
            pl.BlockSpec((A, tile_n, D), lambda i: (0, i, 0)),  # ancestors (A, N, D)
            pl.BlockSpec((D, K), lambda i: (0, 0)),             # Wl
            pl.BlockSpec((D, K), lambda i: (0, 0)),             # Wa
            pl.BlockSpec((2, K), lambda i: (0, 0)),             # [b_attn ; w_comb]
        ],
        out_specs=pl.BlockSpec((tile_n, D), lambda i: (i, 0)),
        out_shape=jax.ShapeDtypeStruct((N, D), jnp.float32),
        compiler_params=pltpu.CompilerParams(
            dimension_semantics=("parallel",),
            vmem_limit_bytes=vmem_limit,
        ),
    )(cnt, l_emb, a_emb, wl, wa, bw)


def init_onto_emb_params(key, dx_vocab, dx_num_anc, emb_dim, attn_dim):
    k1, k2, k3, k4, k5 = jax.random.split(key, 5)
    return {
        # nn.Embedding(vocab + num_ancestors, emb_dim)
        "emb": jax.random.normal(k1, (dx_vocab + dx_num_anc, emb_dim), jnp.float32),
        # nn.Linear(2*emb_dim, attn_dim): weight (attn_dim, 2*emb_dim), bias (attn_dim,)
        "w_attn": jax.random.normal(k2, (attn_dim, 2 * emb_dim), jnp.float32) * 0.1,
        "b_attn": jax.random.normal(k3, (attn_dim,), jnp.float32) * 0.1,
        # nn.Linear(attn_dim, 1): weight (1, attn_dim), bias (1,)
        "w_comb": jax.random.normal(k4, (1, attn_dim), jnp.float32) * 0.1,
        "b_comb": jax.random.normal(k5, (1,), jnp.float32) * 0.1,
    }


def onto_emb_forward(params, leaves_list, ancestors_list, *, tile_n=512):
    emb = params["emb"]
    D = emb.shape[1]
    K = params["w_attn"].shape[0]

    # attn(concat([l, a], -1)) == l @ Wl + a @ Wa + b  (split the 2D-wide weight).
    wl = params["w_attn"][:, :D].T.astype(jnp.bfloat16)      # (D, K)
    wa = params["w_attn"][:, D:].T.astype(jnp.bfloat16)      # (D, K)
    # attnCombine's bias cancels in the softmax -> dropped.  Remaining small
    # vectors packed into one operand: row 0 = attn bias, row 1 = combine w.
    bw = jnp.stack([params["b_attn"],
                    params["w_comb"].reshape(-1)], axis=0).astype(jnp.float32)

    if not leaves_list:
        return jnp.zeros((1, D), jnp.float32)

    a_max = max(int(a.shape[1]) for a in ancestors_list)
    n_tot = sum(int(l.shape[0]) for l in leaves_list)

    # Fuse the ragged groups along one code axis.  GRAM repeats the same leaf
    # index across a code's ancestor slots, so the leaf index is taken once.
    # TODO(synk): this assumes the GRAM invariant leaves[i, :] == leaves[i, 0].
    lv_rows, an_rows, cnt_rows = [], [], []
    for lv, an in zip(leaves_list, ancestors_list):
        n, a = an.shape
        lv_rows.append(lv[:, 0])
        an_rows.append(jnp.pad(an, ((0, 0), (0, a_max - a))))
        cnt_rows.append(jnp.full((n,), a, jnp.int32))
    lv_idx = jnp.concatenate(lv_rows, axis=0)
    an_idx = jnp.concatenate(an_rows, axis=0)
    cnt = jnp.concatenate(cnt_rows, axis=0)

    # Tile size: <= tile_n, VMEM-budgeted (v7x-safe: ~24 MiB of double-buffered
    # tiles), and split so the parallel grid axis has >= 2 steps when there is
    # enough work (v7x has two TensorCores).
    budget = 24 << 20
    per_code = 4 * a_max * D + 12 * D + 8          # bytes/code across all buffers
    cap = max(8, (budget // per_code) // 8 * 8)
    tile = max(8, min(_round_up(tile_n, 8), cap, _round_up(n_tot, 8)))
    if n_tot >= 16 and n_tot <= tile:
        tile = _round_up((n_tot + 1) // 2, 8)
    n_pad = _round_up(n_tot, tile)

    pad = n_pad - n_tot
    lv_idx = jnp.pad(lv_idx, ((0, pad),))
    an_idx = jnp.pad(an_idx, ((0, pad), (0, 0)))
    cnt = jnp.pad(cnt, ((0, pad),)).reshape(n_pad, 1)

    # Plain-JAX gather (bf16): leaves once as (N, D); ancestors ancestor-major
    # (A, N, D) so the kernel reads dense (TILE_N, D) slabs per slot.
    emb_bf = emb.astype(jnp.bfloat16)
    l_emb = jnp.take(emb_bf, lv_idx, axis=0)        # (N_pad, D)
    a_emb = jnp.take(emb_bf, an_idx.T, axis=0)      # (A_max, N_pad, D)

    out = onto_attn_batched(cnt, l_emb, a_emb, wl, wa, bw, tile_n=tile)
    out = out[:n_tot]
    # torch appends a zeros(1, D) row before the final concat along dim=0.
    return jnp.concatenate([out, jnp.zeros((1, D), jnp.float32)], axis=0)


def _reference_forward(params, leaves_list, ancestors_list):
    # Pure-JAX f32 reference mirroring the torch forward, for a correctness check.
    emb = params["emb"]
    D = emb.shape[1]
    outs = []
    for leaves, ancestors in zip(leaves_list, ancestors_list):
        l_emb = emb[leaves]
        a_emb = emb[ancestors]
        attn_in = jnp.concatenate([l_emb, a_emb], axis=2)
        h = jnp.tanh(attn_in @ params["w_attn"].T + params["b_attn"])
        pre = h @ params["w_comb"].T + params["b_comb"]
        attn = jax.nn.softmax(pre, axis=1)
        outs.append(jnp.sum(a_emb * attn, axis=1))
    outs.append(jnp.zeros((1, D), jnp.float32))
    return jnp.concatenate(outs, axis=0)


if __name__ == "__main__":
    dxVocabSize, dxnumAncestors, dxEmbDim, attnDim = 20, 12, 32, 16

    key = jax.random.PRNGKey(0)
    pkey, i1, i2, i3, i4 = jax.random.split(key, 5)
    params = init_onto_emb_params(pkey, dxVocabSize, dxnumAncestors, dxEmbDim, attnDim)

    total = dxVocabSize + dxnumAncestors
    # Two ragged groups, GRAM layout: each code's leaf index repeated across
    # its ancestor slots (codes in a group share the same ancestor count).
    leaf1 = jax.random.randint(i1, (6, 1), 0, dxVocabSize, dtype=jnp.int32)
    leaf2 = jax.random.randint(i2, (4, 1), 0, dxVocabSize, dtype=jnp.int32)
    leaves_list = [jnp.tile(leaf1, (1, 2)), jnp.tile(leaf2, (1, 4))]
    ancestors_list = [
        jax.random.randint(i3, (6, 2), 0, total, dtype=jnp.int32),
        jax.random.randint(i4, (4, 4), 0, total, dtype=jnp.int32),
    ]

    out = onto_emb_forward(params, leaves_list, ancestors_list)
    out = jax.block_until_ready(out)

    ref = _reference_forward(params, leaves_list, ancestors_list)
    assert out.shape == (6 + 4 + 1, dxEmbDim), out.shape
    max_err = float(jnp.max(jnp.abs(out - ref)))
    # bf16 slabs + approx reciprocal -> relaxed tolerance vs the f32 reference.
    assert jnp.allclose(out, ref, rtol=5e-2, atol=5e-2), f"mismatch, max abs err {max_err}"

    print("KERNEL_OK")
</pallas_src>

<mosaic_0001>
module attributes {stable_mosaic.version = 11 : i64} {
  func.func @_onto_attn_kernel(%arg0: i32, %arg1: memref<16x1xi32, #tpu.memory_space<vmem>>, %arg2: memref<16x32xbf16, #tpu.memory_space<vmem>>, %arg3: memref<4x16x32xbf16, #tpu.memory_space<vmem>>, %arg4: memref<32x16xbf16, #tpu.memory_space<vmem>>, %arg5: memref<32x16xbf16, #tpu.memory_space<vmem>>, %arg6: memref<2x16xf32, #tpu.memory_space<vmem>>, %arg7: memref<16x32xf32, #tpu.memory_space<vmem>>) attributes {dimension_semantics = [#tpu.dimension_semantics<parallel>], iteration_bounds = array<i64: 1>, scalar_prefetch = 0 : i64, scratch_operands = 0 : i64, tpu.core_type = #tpu.core_type<tc>, window_params = [{transform_indices = @transform_0, window_bounds = array<i64: 16, 1>}, {transform_indices = @transform_1, window_bounds = array<i64: 16, 32>}, {transform_indices = @transform_2, window_bounds = array<i64: 4, 16, 32>}, {pipeline_mode = #tpu.pipeline_mode<synchronous>, transform_indices = @transform_3, window_bounds = array<i64: 32, 16>}, {pipeline_mode = #tpu.pipeline_mode<synchronous>, transform_indices = @transform_4, window_bounds = array<i64: 32, 16>}, {pipeline_mode = #tpu.pipeline_mode<synchronous>, transform_indices = @transform_5, window_bounds = array<i64: 2, 16>}, {transform_indices = @transform_6, window_bounds = array<i64: 16, 32>}]} {
    %c0 = arith.constant 0 : index
    %c0_0 = arith.constant 0 : index
    %0 = vector.load %arg6[%c0, %c0_0] : memref<2x16xf32, #tpu.memory_space<vmem>>, vector<1x16xf32>
    %c1 = arith.constant 1 : index
    %c0_1 = arith.constant 0 : index
    %1 = vector.load %arg6[%c1, %c0_1] : memref<2x16xf32, #tpu.memory_space<vmem>>, vector<1x16xf32>
    %2 = vector.shape_cast %1 : vector<1x16xf32> to vector<1x1x16xf32>
    %c0_2 = arith.constant 0 : index
    %c0_3 = arith.constant 0 : index
    %3 = vector.load %arg2[%c0_2, %c0_3] : memref<16x32xbf16, #tpu.memory_space<vmem>>, vector<16x32xbf16>
    %c0_4 = arith.constant 0 : index
    %c0_5 = arith.constant 0 : index
    %4 = vector.load %arg4[%c0_4, %c0_5] : memref<32x16xbf16, #tpu.memory_space<vmem>>, vector<32x16xbf16>
    %cst = arith.constant dense<0.000000e+00> : vector<16x16xf32>
    %5 = tpu.matmul %3, %4, %cst {dimension_numbers = #tpu.dot_dimension_numbers<[1], [0], [0], [1], [0, 0, 1, 1], [], []>} : vector<16x32xbf16>, vector<32x16xbf16>, vector<16x16xf32> -> vector<16x16xf32>
    %6 = vector.broadcast %0 : vector<1x16xf32> to vector<16x16xf32>
    %7 = arith.addf %5, %6 : vector<16x16xf32>
    %c0_6 = arith.constant 0 : index
    %c0_7 = arith.constant 0 : index
    %c0_8 = arith.constant 0 : index
    %8 = vector.load %arg3[%c0_6, %c0_7, %c0_8] : memref<4x16x32xbf16, #tpu.memory_space<vmem>>, vector<4x16x32xbf16>
    %9 = vector.shape_cast %8 : vector<4x16x32xbf16> to vector<64x32xbf16>
    %c0_9 = arith.constant 0 : index
    %c0_10 = arith.constant 0 : index
    %10 = vector.load %arg5[%c0_9, %c0_10] : memref<32x16xbf16, #tpu.memory_space<vmem>>, vector<32x16xbf16>
    %cst_11 = arith.constant dense<0.000000e+00> : vector<64x16xf32>
    %11 = tpu.matmul %9, %10, %cst_11 {dimension_numbers = #tpu.dot_dimension_numbers<[1], [0], [0], [1], [0, 0, 1, 1], [], []>} : vector<64x32xbf16>, vector<32x16xbf16>, vector<64x16xf32> -> vector<64x16xf32>
    %12 = vector.shape_cast %11 : vector<64x16xf32> to vector<4x16x16xf32>
    %13 = vector.shape_cast %7 : vector<16x16xf32> to vector<1x16x16xf32>
    %14 = vector.broadcast %13 : vector<1x16x16xf32> to vector<4x16x16xf32>
    %15 = arith.addf %12, %14 : vector<4x16x16xf32>
    %16 = math.tanh %15 : vector<4x16x16xf32>
    %17 = vector.broadcast %2 : vector<1x1x16xf32> to vector<4x16x16xf32>
    %18 = arith.mulf %16, %17 : vector<4x16x16xf32>
    %cst_12 = arith.constant dense<0.000000e+00> : vector<4x16xf32>
    %19 = vector.multi_reduction <add>, %18, %cst_12 [2] : vector<4x16x16xf32> to vector<4x16xf32>
    %20 = tpu.transpose %19, [1, 0] : vector<4x16xf32> -> vector<16x4xf32>
    %21 = tpu.iota {dimensions = array<i32: 1>} : vector<16x4xi32>
    %c0_13 = arith.constant 0 : index
    %c0_14 = arith.constant 0 : index
    %22 = vector.load %arg1[%c0_13, %c0_14] : memref<16x1xi32, #tpu.memory_space<vmem>>, vector<16x1xi32>
    %23 = vector.broadcast %22 : vector<16x1xi32> to vector<16x4xi32>
    %24 = arith.cmpi slt, %21, %23 : vector<16x4xi32>
    %cst_15 = arith.constant -1.000000e+30 : f32
    %25 = vector.broadcast %cst_15 : f32 to vector<16x4xf32>
    %26 = arith.select %24, %20, %25 : vector<16x4xi1>, vector<16x4xf32>
    %cst_16 = arith.constant dense<0xFF800000> : vector<16xf32>
    %27 = vector.multi_reduction <maximumf>, %26, %cst_16 [1] : vector<16x4xf32> to vector<16xf32>
    %28 = vector.shape_cast %27 : vector<16xf32> to vector<16x1xf32>
    %29 = vector.broadcast %28 : vector<16x1xf32> to vector<16x4xf32>
    %30 = arith.subf %26, %29 : vector<16x4xf32>
    %31 = math.exp %30 : vector<16x4xf32>
    %cst_17 = arith.constant dense<0.000000e+00> : vector<16xf32>
    %32 = vector.multi_reduction <add>, %31, %cst_17 [1] : vector<16x4xf32> to vector<16xf32>
    %33 = vector.shape_cast %32 : vector<16xf32> to vector<16x1xf32>
    %34 = tpu.reciprocal %33 {approx = true} : vector<16x1xf32> -> vector<16x1xf32>
    %35 = vector.broadcast %34 : vector<16x1xf32> to vector<16x4xf32>
    %36 = arith.mulf %31, %35 : vector<16x4xf32>
    %c0_18 = arith.constant 0 : index
    %c0_19 = arith.constant 0 : index
    %c0_20 = arith.constant 0 : index
    %37 = vector.load %arg3[%c0_18, %c0_19, %c0_20] : memref<4x16x32xbf16, #tpu.memory_space<vmem>>, vector<1x16x32xbf16>
    %38 = vector.shape_cast %37 : vector<1x16x32xbf16> to vector<16x32xbf16>
    %39 = arith.extf %38 : vector<16x32xbf16> to vector<16x32xf32>
    %40 = vector.extract_strided_slice %36 {offsets = [0, 0], sizes = [16, 1], strides = [1, 1]} : vector<16x4xf32> to vector<16x1xf32>
    %41 = vector.broadcast %40 : vector<16x1xf32> to vector<16x32xf32>
    %42 = arith.mulf %39, %41 : vector<16x32xf32>
    %c1_21 = arith.constant 1 : index
    %c0_22 = arith.constant 0 : index
    %c0_23 = arith.constant 0 : index
    %43 = vector.load %arg3[%c1_21, %c0_22, %c0_23] : memref<4x16x32xbf16, #tpu.memory_space<vmem>>, vector<1x16x32xbf16>
    %44 = vector.shape_cast %43 : vector<1x16x32xbf16> to vector<16x32xbf16>
    %45 = arith.extf %44 : vector<16x32xbf16> to vector<16x32xf32>
    %46 = vector.extract_strided_slice %36 {offsets = [0, 1], sizes = [16, 1], strides = [1, 1]} : vector<16x4xf32> to vector<16x1xf32>
    %47 = vector.broadcast %46 : vector<16x1xf32> to vector<16x32xf32>
    %48 = arith.mulf %45, %47 : vector<16x32xf32>
    %49 = arith.addf %42, %48 : vector<16x32xf32>
    %c2 = arith.constant 2 : index
    %c0_24 = arith.constant 0 : index
    %c0_25 = arith.constant 0 : index
    %50 = vector.load %arg3[%c2, %c0_24, %c0_25] : memref<4x16x32xbf16, #tpu.memory_space<vmem>>, vector<1x16x32xbf16>
    %51 = vector.shape_cast %50 : vector<1x16x32xbf16> to vector<16x32xbf16>
    %52 = arith.extf %51 : vector<16x32xbf16> to vector<16x32xf32>
    %53 = vector.extract_strided_slice %36 {offsets = [0, 2], sizes = [16, 1], strides = [1, 1]} : vector<16x4xf32> to vector<16x1xf32>
    %54 = vector.broadcast %53 : vector<16x1xf32> to vector<16x32xf32>
    %55 = arith.mulf %52, %54 : vector<16x32xf32>
    %56 = arith.addf %49, %55 : vector<16x32xf32>
    %c3 = arith.constant 3 : index
    %c0_26 = arith.constant 0 : index
    %c0_27 = arith.constant 0 : index
    %57 = vector.load %arg3[%c3, %c0_26, %c0_27] : memref<4x16x32xbf16, #tpu.memory_space<vmem>>, vector<1x16x32xbf16>
    %58 = vector.shape_cast %57 : vector<1x16x32xbf16> to vector<16x32xbf16>
    %59 = arith.extf %58 : vector<16x32xbf16> to vector<16x32xf32>
    %60 = vector.extract_strided_slice %36 {offsets = [0, 3], sizes = [16, 1], strides = [1, 1]} : vector<16x4xf32> to vector<16x1xf32>
    %61 = vector.broadcast %60 : vector<16x1xf32> to vector<16x32xf32>
    %62 = arith.mulf %59, %61 : vector<16x32xf32>
    %63 = arith.addf %56, %62 : vector<16x32xf32>
    %c0_28 = arith.constant 0 : index
    %c0_29 = arith.constant 0 : index
    %64 = vector.load %arg7[%c0_28, %c0_29] : memref<16x32xf32, #tpu.memory_space<vmem>>, vector<16x32xf32>
    tpu.vector_store %arg7[%c0_28, %c0_29], %63 {strides = array<i32>} : memref<16x32xf32, #tpu.memory_space<vmem>>, vector<16x32xf32>,
    return
  }
  func.func @transform_0(%arg0: i32) -> (i32, i32) {
    %c0_i32 = arith.constant 0 : i32
    %c0_i32_0 = arith.constant 0 : i32
    return %arg0, %c0_i32 : i32, i32
  }
  func.func @transform_1(%arg0: i32) -> (i32, i32) {
    %c0_i32 = arith.constant 0 : i32
    %c0_i32_0 = arith.constant 0 : i32
    return %arg0, %c0_i32 : i32, i32
  }
  func.func @transform_2(%arg0: i32) -> (i32, i32, i32) {
    %c0_i32 = arith.constant 0 : i32
    %c0_i32_0 = arith.constant 0 : i32
    %c0_i32_1 = arith.constant 0 : i32
    return %c0_i32, %arg0, %c0_i32_0 : i32, i32, i32
  }
  func.func @transform_3(%arg0: i32) -> (i32, i32) {
    %c0_i32 = arith.constant 0 : i32
    %c0_i32_0 = arith.constant 0 : i32
    %c0_i32_1 = arith.constant 0 : i32
    return %c0_i32, %c0_i32_0 : i32, i32
  }
  func.func @transform_4(%arg0: i32) -> (i32, i32) {
    %c0_i32 = arith.constant 0 : i32
    %c0_i32_0 = arith.constant 0 : i32
    %c0_i32_1 = arith.constant 0 : i32
    return %c0_i32, %c0_i32_0 : i32, i32
  }
  func.func @transform_5(%arg0: i32) -> (i32, i32) {
    %c0_i32 = arith.constant 0 : i32
    %c0_i32_0 = arith.constant 0 : i32
    %c0_i32_1 = arith.constant 0 : i32
    return %c0_i32, %c0_i32_0 : i32, i32
  }
  func.func @transform_6(%arg0: i32) -> (i32, i32) {
    %c0_i32 = arith.constant 0 : i32
    %c0_i32_0 = arith.constant 0 : i32
    return %arg0, %c0_i32 : i32, i32
  }
}

</mosaic_0001>

<llo_original>
// kernel: tpu_custom_call.1
$region0: #{tpu_custom_call.1}
  #allocation0 [shape = 'u32[]', space=smem, size = 0x4, offset = 0x4, fixed_abs, tag = 'smem constant byte address 0x4 - core index']
  #allocation1 [shape = 'u32[144,128]{1,0:T(1,128)}', space=vmem, size = 0x12000, scoped, tag = 'internal scratch']
  %s0 = inlined_call_operand.vmem [shape: s32[16,1], index: 0, kind: input, shape index: {}]
  %s1 = inlined_call_operand.vmem [shape: bf16[16,32], index: 1, kind: input, shape index: {}]
  %s2 = inlined_call_operand.vmem [shape: bf16[4,16,32], index: 2, kind: input, shape index: {}]
  %s3 = inlined_call_operand.vmem [shape: bf16[32,16], index: 3, kind: input, shape index: {}]
  %s4 = inlined_call_operand.vmem [shape: bf16[32,16], index: 4, kind: input, shape index: {}]
  %s5 = inlined_call_operand.vmem [shape: f32[2,16], index: 5, kind: input, shape index: {}]
  %s6 = inlined_call_operand.hbm [shape: f32[16,32], index: 6, kind: output, shape index: {}]
  %s7 = sld [smem:[#allocation0]]
  $region34: #{tpu_custom_call.1} parent=0
    _
  %s9 = ssub.s32 1, %s7
  %s10 = scalar_select 0, %s9, %s7
  $region1: #{tpu_custom_call.1} parent=0
    #allocation2 [shape = 'u8[8192]{0}', space=vmem, size = 0x2000, scoped, tag = 'output window, operand 0, single buffered']
    #allocation3 [shape = 's32[1]{0}', space=sflag, size = 0x4, scoped, tag = 'scoped memory for tpu_custom_call.1']
    %11 = vsyncpa [#allocation3], 0
    // Predicated region
    $region2: #{tpu_custom_call.1} parent=1 // pred_check
      _
    $region3: #{tpu_custom_call.1} parent=1 // pred_check_branch
      %13 = sbr.rel (0) target = $region5
    $region4: #{tpu_custom_call.1} parent=1 // pred_region
      _
    $region5: #{tpu_custom_call.1} parent=1 // pred_fallthru
      _
    // Predicated region
    $region6: #{tpu_custom_call.1} parent=1 // pred_check
      _
    $region7: #{tpu_custom_call.1} parent=1 // pred_check_branch
      %15 = sbr.rel (0) target = $region9
    $region8: #{tpu_custom_call.1} parent=1 // pred_region
      _
    $region9: #{tpu_custom_call.1} parent=1 // pred_fallthru
      _
    // Predicated region
    $region10: #{tpu_custom_call.1} parent=1 // pred_check
      _
    $region11: #{tpu_custom_call.1} parent=1 // pred_check_branch
      %17 = sbr.rel (0) target = $region13
    $region12: #{tpu_custom_call.1} parent=1 // pred_region
      _
    $region13: #{tpu_custom_call.1} parent=1 // pred_fallthru
      _
    // Predicated region
    $region14: #{tpu_custom_call.1} parent=1 // pred_check
      _
    $region15: #{tpu_custom_call.1} parent=1 // pred_check_branch
      %19 = sbr.rel (0) target = $region17
    $region16: #{tpu_custom_call.1} parent=1 // pred_region
      _
    $region17: #{tpu_custom_call.1} parent=1 // pred_fallthru
      _
    // Predicated region
    $region18: #{tpu_custom_call.1} parent=1 // pred_check
      _
    $region19: #{tpu_custom_call.1} parent=1 // pred_check_branch
      %21 = sbr.rel (0) target = $region21
    $region20: #{tpu_custom_call.1} parent=1 // pred_region
      _
    $region21: #{tpu_custom_call.1} parent=1 // pred_fallthru
      _
    // Predicated region
    $region22: #{tpu_custom_call.1} parent=1 // pred_check
      _
    $region23: #{tpu_custom_call.1} parent=1 // pred_check_branch
      %23 = sbr.rel (0) target = $region25
    $region24: #{tpu_custom_call.1} parent=1 // pred_region
      _
    $region25: #{tpu_custom_call.1} parent=1 // pred_fallthru
      _
    %v25 = vld [vmem:[%s5] sm:$0x1]
    %v26 = vld [vmem:[%s5 + $0x1] sm:$0x1]
    %v27 = vld [vmem:[%s1] sm:$0xf]
    %v28 = vld [vmem:[%s1 + $0x4] sm:$0xf]
    %v29 = vld [vmem:[%s3] sm:$0xf]
    %v30 = vld [vmem:[%s3 + $0x4] sm:$0xf]
    %v31 = vld [vmem:[%s3 + $0x8] sm:$0xf]
    %v32 = vld [vmem:[%s3 + $0xc] sm:$0xf]
    %v33 = vlaneseq
    %v34 = vshrl.u32 %v33, 7
    %v35 = vsub.s32 0, %v34
    %v36 = vrot.slane %v25, %v35
    %v39 = vunpack.c.l.b16 %v27
    %v40 = vunpack.c.l.b16 %v28
    %v41 = vpack.c.b16 %v40, %v39
    %v46 = vunpack.c.l.b16 %v29
    %v47 = vunpack.c.l.b16 %v30
    %v48 = vunpack.c.l.b16 %v31
    %v49 = vunpack.c.l.b16 %v32
    %v50 = vpack.c.b16 %v47, %v46
    %v51 = vpack.c.b16 %v49, %v48
    %vm54 = vcmask 261120
    %v56 = vsel %vm54, %v41, 0
    %58 = vmatprep.subr.bf16.mxu0 0
    %59 = vmatpush1.bf16.msra.mxu0 0
    %60 = vmatprep.subr.bf16.mxu0 0
    %61 = vmatpush1.bf16.msra.mxu0 0
    %62 = vmatprep.subr.bf16.mxu0 0
    %63 = vmatpush1.bf16.msra.mxu0 0
    %64 = vmatprep.subr.bf16.mxu0 0
    %65 = vmatpush1.bf16.msra.mxu0 0
    %66 = vmatprep.subr.bf16.mxu0 0
    %67 = vmatpush1.bf16.msra.mxu0 0
    %68 = vmatprep.subr.bf16.mxu0 0
    %69 = vmatpush1.bf16.msra.mxu0 0
    %70 = vmatprep.subr.bf16.mxu0 0
    %71 = vmatpush1.bf16.msra.mxu0 %v51
    %72 = vmatprep.subr.bf16.mxu0 0
    %73 = vmatpush1.bf16.msra.mxu0 %v50
    %74 = vmatprep.subr.bf16.mxu0 0
    %75 = vmatpush2.bf16.msra.mxu0 0
    %76 = vmatprep.subr.bf16.mxu0 0
    %77 = vmatpush2.bf16.msra.mxu0 0
    %78 = vmatprep.subr.bf16.mxu0 0
    %79 = vmatpush2.bf16.msra.mxu0 0
    %80 = vmatprep.subr.bf16.mxu0 0
    %81 = vmatpush2.bf16.msra.mxu0 0
    %82 = vmatprep.subr.bf16.mxu0 0
    %83 = vmatpush2.bf16.msra.mxu0 0
    %84 = vmatprep.subr.bf16.mxu0 0
    %85 = vmatpush2.bf16.msra.mxu0 0
    %86 = vmatprep.subr.bf16.mxu0 0
    %87 = vmatpush2.bf16.msra.mxu0 0
    %88 = vmatprep.subr.bf16.mxu0 0
    %89 = vmatpush2.bf16.msra.mxu0 0
    %90 = vmatprep.mubr.bf16.mxu0 0
    %91 = vmatmul.mubr.bf16.gmra.mxu0 %v56
    %v92 = vpop.f32.mrf.mxu0
    %v93 = vadd.f32 %v36, %v92
    %v94 = vpop.f32.mrf.mxu0
    %v95 = vpop.f32.mrf.mxu0
    %v96 = vadd.f32 %v36, %v95
    %v97 = vpop.f32.mrf.mxu0
    %98 = vdwg.mxu0
    %v99 = vld [vmem:[%s2] sm:$0xf]
    %v100 = vld [vmem:[%s2 + $0x4] sm:$0xf]
    %v101 = vld [vmem:[%s2 + $0x8] sm:$0xf]
    %v102 = vld [vmem:[%s2 + $0xc] sm:$0xf]
    %v103 = vld [vmem:[%s2 + $0x10] sm:$0xf]
    %v104 = vld [vmem:[%s2 + $0x14] sm:$0xf]
    %v105 = vld [vmem:[%s2 + $0x18] sm:$0xf]
    %v106 = vld [vmem:[%s2 + $0x1c] sm:$0xf]
    %v107 = vld [vmem:[%s4] sm:$0xf]
    %v108 = vld [vmem:[%s4 + $0x4] sm:$0xf]
    %v109 = vld [vmem:[%s4 + $0x8] sm:$0xf]
    %v110 = vld [vmem:[%s4 + $0xc] sm:$0xf]
    %v119 = vunpack.c.l.b16 %v99
    %v120 = vunpack.c.l.b16 %v100
    %v121 = vunpack.c.l.b16 %v101
    %v122 = vunpack.c.l.b16 %v102
    %v123 = vunpack.c.l.b16 %v103
    %v124 = vunpack.c.l.b16 %v104
    %v125 = vunpack.c.l.b16 %v105
    %v126 = vunpack.c.l.b16 %v106
    %v127 = vpack.c.b16 %v120, %v119
    %v128 = vpack.c.b16 %v122, %v121
    %v129 = vpack.c.b16 %v124, %v123
    %v130 = vpack.c.b16 %v126, %v125
    %v135 = vunpack.c.l.b16 %v107
    %v136 = vunpack.c.l.b16 %v108
    %v137 = vunpack.c.l.b16 %v109
    %v138 = vunpack.c.l.b16 %v110
    %v139 = vpack.c.b16 %v136, %v135
    %v140 = vpack.c.b16 %v138, %v137
    %v144 = vsel %vm54, %v127, 0
    %v147 = vsel %vm54, %v128, 0
    %v150 = vsel %vm54, %v129, 0
    %v153 = vsel %vm54, %v130, 0
    %155 = vmatprep.subr.bf16.mxu0 0
    %156 = vmatpush1.bf16.msra.mxu0 0
    %157 = vmatprep.subr.bf16.mxu0 0
    %158 = vmatpush1.bf16.msra.mxu0 0
    %159 = vmatprep.subr.bf16.mxu0 0
    %160 = vmatpush1.bf16.msra.mxu0 0
    %161 = vmatprep.subr.bf16.mxu0 0
    %162 = vmatpush1.bf16.msra.mxu0 0
    %163 = vmatprep.subr.bf16.mxu0 0
    %164 = vmatpush1.bf16.msra.mxu0 0
    %165 = vmatprep.subr.bf16.mxu0 0
    %166 = vmatpush1.bf16.msra.mxu0 0
    %167 = vmatprep.subr.bf16.mxu0 0
    %168 = vmatpush1.bf16.msra.mxu0 %v140
    %169 = vmatprep.subr.bf16.mxu0 0
    %170 = vmatpush1.bf16.msra.mxu0 %v139
    %171 = vmatprep.subr.bf16.mxu0 0
    %172 = vmatpush2.bf16.msra.mxu0 0
    %173 = vmatprep.subr.bf16.mxu0 0
    %174 = vmatpush2.bf16.msra.mxu0 0
    %175 = vmatprep.subr.bf16.mxu0 0
    %176 = vmatpush2.bf16.msra.mxu0 0
    %177 = vmatprep.subr.bf16.mxu0 0
    %178 = vmatpush2.bf16.msra.mxu0 0
    %179 = vmatprep.subr.bf16.mxu0 0
    %180 = vmatpush2.bf16.msra.mxu0 0
    %181 = vmatprep.subr.bf16.mxu0 0
    %182 = vmatpush2.bf16.msra.mxu0 0
    %183 = vmatprep.subr.bf16.mxu0 0
    %184 = vmatpush2.bf16.msra.mxu0 0
    %185 = vmatprep.subr.bf16.mxu0 0
    %186 = vmatpush2.bf16.msra.mxu0 0
    %187 = vmatprep.mubr.bf16.mxu0 0
    %188 = vmatmul.mubr.bf16.gmra.mxu0 %v144
    %v189 = vpop.f32.mrf.mxu0
    %v190 = vadd.f32 0.0, %v189
    %v191 = vpop.f32.mrf.mxu0
    %v192 = vpop.f32.mrf.mxu0
    %v193 = vadd.f32 0.0, %v192
    %v194 = vpop.f32.mrf.mxu0
    %195 = vmatprep.mubr.bf16.mxu0 0
    %196 = vmatmul.mubr.bf16.gmra.mxu0 %v147
    %v197 = vpop.f32.mrf.mxu0
    %v198 = vadd.f32 0.0, %v197
    %v199 = vpop.f32.mrf.mxu0
    %v200 = vpop.f32.mrf.mxu0
    %v201 = vadd.f32 0.0, %v200
    %v202 = vpop.f32.mrf.mxu0
    %203 = vmatprep.mubr.bf16.mxu0 0
    %204 = vmatmul.mubr.bf16.gmra.mxu0 %v150
    %v205 = vpop.f32.mrf.mxu0
    %v206 = vadd.f32 0.0, %v205
    %v207 = vpop.f32.mrf.mxu0
    %v208 = vpop.f32.mrf.mxu0
    %v209 = vadd.f32 0.0, %v208
    %v210 = vpop.f32.mrf.mxu0
    %211 = vmatprep.mubr.bf16.mxu0 0
    %212 = vmatmul.mubr.bf16.gmra.mxu0 %v153
    %v213 = vpop.f32.mrf.mxu0
    %v214 = vadd.f32 0.0, %v213
    %v215 = vpop.f32.mrf.mxu0
    %v216 = vpop.f32.mrf.mxu0
    %v217 = vadd.f32 0.0, %v216
    %v218 = vpop.f32.mrf.mxu0
    %219 = vdwg.mxu0
    %v220 = vadd.f32 %v190, %v93
    %v221 = vadd.f32 %v193, %v96
    %v222 = vadd.f32 %v198, %v93
    %v223 = vadd.f32 %v201, %v96
    %v224 = vadd.f32 %v206, %v93
    %v225 = vadd.f32 %v209, %v96
    %v226 = vadd.f32 %v214, %v93
    %v227 = vadd.f32 %v217, %v96
    %v228 = vtanh.pop %v220
    %v229 = vtanh.pop %v221
    %v230 = vtanh.pop %v222
    %v231 = vtanh.pop %v223
    %v232 = vtanh.pop %v224
    %v233 = vtanh.pop %v225
    %v234 = vtanh.pop %v226
    %v235 = vtanh.pop %v227
    %v236 = vlaneseq
    %v237 = vshrl.u32 %v236, 7
    %v238 = vsub.s32 0, %v237
    %v239 = vrot.slane %v26, %v238
    %v240 = vmul.f32 %v228, %v239
    %v241 = vmul.f32 %v229, %v239
    %v242 = vmul.f32 %v230, %v239
    %v243 = vmul.f32 %v231, %v239
    %v244 = vmul.f32 %v232, %v239
    %v245 = vmul.f32 %v233, %v239
    %v246 = vmul.f32 %v234, %v239
    %v247 = vmul.f32 %v235, %v239
    %vm248 = vcmask 130048
    %v249 = vsel %vm248, %v240, 0.0
    %250 = vadd.xlane.f32.xlu0 %v249
    %v251 = vpop.xlane.xlu0 %250
    %v252 = vsel %vm248, %v241, 0.0
    %253 = vadd.xlane.f32.xlu0 %v252
    %v254 = vpop.xlane.xlu0 %253
    %v255 = vsel %vm248, %v242, 0.0
    %256 = vadd.xlane.f32.xlu0 %v255
    %v257 = vpop.xlane.xlu0 %256
    %v258 = vsel %vm248, %v243, 0.0
    %259 = vadd.xlane.f32.xlu0 %v258
    %v260 = vpop.xlane.xlu0 %259
    %v261 = vsel %vm248, %v244, 0.0
    %262 = vadd.xlane.f32.xlu0 %v261
    %v263 = vpop.xlane.xlu0 %262
    %v264 = vsel %vm248, %v245, 0.0
    %265 = vadd.xlane.f32.xlu0 %v264
    %v266 = vpop.xlane.xlu0 %265
    %v267 = vsel %vm248, %v246, 0.0
    %268 = vadd.xlane.f32.xlu0 %v267
    %v269 = vpop.xlane.xlu0 %268
    %v270 = vsel %vm248, %v247, 0.0
    %271 = vadd.xlane.f32.xlu0 %v270
    %v272 = vpop.xlane.xlu0 %271
    %v281 = vlaneseq
    %v282 = vand.u32 %v281, 127
    %v283 = vlaneseq
    %v284 = vshrl.u32 %v283, 7
    %v285 = vsub.s32 %v282, %v284
    %v286 = vrot.slane %v251, %v285
    %v287 = vadd.s32 %v282, 4294967288
    %v288 = vlaneseq
    %v289 = vshrl.u32 %v288, 7
    %v290 = vsub.s32 %v287, %v289
    %v291 = vrot.slane %v254, %v290
    %vm292 = vcmask 130112
    %v293 = vsel %vm292, %v291, %v286
    %v294 = vlaneseq
    %v295 = vshrl.u32 %v294, 7
    %v296 = vsub.s32 %v282, %v295
    %v297 = vrot.slane %v257, %v296
    %v298 = vlaneseq
    %v299 = vshrl.u32 %v298, 7
    %v300 = vsub.s32 %v287, %v299
    %v301 = vrot.slane %v260, %v300
    %v302 = vsel %vm292, %v301, %v297
    %v303 = vlaneseq
    %v304 = vshrl.u32 %v303, 7
    %v305 = vsub.s32 %v282, %v304
    %v306 = vrot.slane %v263, %v305
    %v307 = vlaneseq
    %v308 = vshrl.u32 %v307, 7
    %v309 = vsub.s32 %v287, %v308
    %v310 = vrot.slane %v266, %v309
    %v311 = vsel %vm292, %v310, %v306
    %v312 = vlaneseq
    %v313 = vshrl.u32 %v312, 7
    %v314 = vsub.s32 %v282, %v313
    %v315 = vrot.slane %v269, %v314
    %v316 = vlaneseq
    %v317 = vshrl.u32 %v316, 7
    %v318 = vsub.s32 %v287, %v317
    %v319 = vrot.slane %v272, %v318
    %v320 = vsel %vm292, %v319, %v315
    %vm321 = vcmask 1041409
    %v322 = vsel %vm321, %v302, %v293
    %vm323 = vcmask 1042434
    %v324 = vsel %vm323, %v311, %v322
    %vm325 = vcmask 1043459
    %v326 = vsel %vm325, %v320, %v324
    %328 = vxpose.xlu0.b32.start [1/16] %v326, 128
    %329 = vxpose.xlu0.b32.cont [2/16] 0.0, 128
    %330 = vxpose.xlu0.b32.cont [3/16] 0.0, 128
    %331 = vxpose.xlu0.b32.cont [4/16] 0.0, 128
    %332 = vxpose.xlu0.b32.cont [5/16] 0.0, 128
    %333 = vxpose.xlu0.b32.cont [6/16] 0.0, 128
    %334 = vxpose.xlu0.b32.cont [7/16] 0.0, 128
    %335 = vxpose.xlu0.b32.cont [8/16] 0.0, 128
    %336 = vxpose.xlu0.b32.cont [9/16] 0.0, 128
    %337 = vxpose.xlu0.b32.cont [10/16] 0.0, 128
    %338 = vxpose.xlu0.b32.cont [11/16] 0.0, 128
    %339 = vxpose.xlu0.b32.cont [12/16] 0.0, 128
    %340 = vxpose.xlu0.b32.cont [13/16] 0.0, 128
    %341 = vxpose.xlu0.b32.cont [14/16] 0.0, 128
    %342 = vxpose.xlu0.b32.cont [15/16] 0.0, 128
    %343 = vxpose.xlu0.b32.end [16/16] 0.0, 128
    %v344 = vpop.trf.xlu0
    %v345 = vpop.trf.xlu0
    %v346 = vpop.trf.xlu0
    %v347 = vpop.trf.xlu0
    %v348 = vpop.trf.xlu0
    %v349 = vpop.trf.xlu0
    %v350 = vpop.trf.xlu0
    %v351 = vpop.trf.xlu0
    %v352 = vpop.trf.xlu0
    %v353 = vpop.trf.xlu0
    %v354 = vpop.trf.xlu0
    %v355 = vpop.trf.xlu0
    %v356 = vpop.trf.xlu0
    %v357 = vpop.trf.xlu0
    %v358 = vpop.trf.xlu0
    %v359 = vpop.trf.xlu0
    %v360 = vld [vmem:[%s0] sm:$0xff]
    %v361 = vld [vmem:[%s0 + $0x8] sm:$0xff]
    %362 = vset.pattern.permute.xlu0 0
    %363 = vperm.xlu0 %362, %v360
    %v364 = vpop.permute.xlu0 %363
    %365 = vset.pattern.permute.xlu0 0
    %366 = vperm.xlu0 %365, %v361
    %v367 = vpop.permute.xlu0 %366
    %vm368 = vcmp.lt.s32.totalorder %v282, %v364
    %vm369 = vcmp.lt.s32.totalorder %v282, %v367
    %v370 = vsel %vm368, %v344, -1e+30
    %v371 = vsel %vm369, %v345, -1e+30
    %vm372 = vcmask 31744
    %v373 = vsel %vm372, %v370, -inf
    %374 = vmax.xlane.f32.xlu0 %v373
    %v375 = vpop.xlane.xlu0 %374
    %v376 = vsel %vm372, %v371, -inf
    %377 = vmax.xlane.f32.xlu0 %v376
    %v378 = vpop.xlane.xlu0 %377
    %v379 = vsub.f32 %v370, %v375
    %v380 = vsub.f32 %v371, %v378
    %v381 = vmul.f32 %v379, 1.442695
    %v382 = vpow.pop %v381
    %v383 = vmul.f32 %v380, 1.442695
    %v384 = vpow.pop %v383
    %v385 = vsel %vm372, %v382, 0.0
    %386 = vadd.xlane.f32.xlu0 %v385
    %v387 = vpop.xlane.xlu0 %386
    %v388 = vsel %vm372, %v384, 0.0
    %389 = vadd.xlane.f32.xlu0 %v388
    %v390 = vpop.xlane.xlu0 %389
    %v391 = vrcp.pop %v387
    %v392 = vrcp.pop %v390
    %v393 = vmul.f32 %v382, %v391
    %v394 = vmul.f32 %v384, %v392
    %v395 = vld [vmem:[%s2] sm:$0xf]
    %v396 = vld [vmem:[%s2 + $0x4] sm:$0xf]
    %v397 = vunpack.c.l.bf16 %v395
    %v398 = vunpack.c.l.bf16 %v396
    %400 = vset.pattern.permute.xlu0 0
    %401 = vperm.xlu0 %400, %v393
    %v402 = vpop.permute.xlu0 %401
    %405 = vset.pattern.permute.xlu0 0
    %406 = vperm.xlu0 %405, %v394
    %v407 = vpop.permute.xlu0 %406
    %v409 = vmul.f32 %v397, %v402
    %v410 = vmul.f32 %v398, %v407
    %s411 = scalar_lea.vmem %s2, 8
    %v412 = vld [vmem:[%s411] sm:$0xf]
    %v413 = vld [vmem:[%s411 + $0x4] sm:$0xf]
    %v414 = vunpack.c.l.bf16 %v412
    %v415 = vunpack.c.l.bf16 %v413
    %416 = vset.pattern.permute.xlu0 1
    %417 = vperm.xlu0 %416, %v393
    %v418 = vpop.permute.xlu0 %417
    %420 = vset.pattern.permute.xlu0 1
    %421 = vperm.xlu0 %420, %v394
    %v422 = vpop.permute.xlu0 %421
    %v424 = vmul.f32 %v414, %v418
    %v425 = vmul.f32 %v415, %v422
    %v426 = vadd.f32 %v409, %v424
    %v427 = vadd.f32 %v410, %v425
    %s428 = scalar_lea.vmem %s2, 16
    %v429 = vld [vmem:[%s428] sm:$0xf]
    %v430 = vld [vmem:[%s428 + $0x4] sm:$0xf]
    %v431 = vunpack.c.l.bf16 %v429
    %v432 = vunpack.c.l.bf16 %v430
    %433 = vset.pattern.permute.xlu0 2
    %434 = vperm.xlu0 %433, %v393
    %v435 = vpop.permute.xlu0 %434
    %437 = vset.pattern.permute.xlu0 2
    %438 = vperm.xlu0 %437, %v394
    %v439 = vpop.permute.xlu0 %438
    %v441 = vmul.f32 %v431, %v435
    %v442 = vmul.f32 %v432, %v439
    %v443 = vadd.f32 %v426, %v441
    %v444 = vadd.f32 %v427, %v442
    %s445 = scalar_lea.vmem %s2, 24
    %v446 = vld [vmem:[%s445] sm:$0xf]
    %v447 = vld [vmem:[%s445 + $0x4] sm:$0xf]
    %v448 = vunpack.c.l.bf16 %v446
    %v449 = vunpack.c.l.bf16 %v447
    %450 = vset.pattern.permute.xlu0 3
    %451 = vperm.xlu0 %450, %v393
    %v452 = vpop.permute.xlu0 %451
    %454 = vset.pattern.permute.xlu0 3
    %455 = vperm.xlu0 %454, %v394
    %v456 = vpop.permute.xlu0 %455
    %v458 = vmul.f32 %v448, %v452
    %v459 = vmul.f32 %v449, %v456
    %v460 = vadd.f32 %v443, %v458
    %v461 = vadd.f32 %v444, %v459
    %462 = vst.msk [vmem:[#allocation2] sm:$0xff] %vm54, %v460
    %463 = vst.msk [vmem:[#allocation2 + $0x8] sm:$0xff] %vm54, %v461
    // Predicated region
    $region26: #{tpu_custom_call.1} parent=1 // pred_check
      _
    $region27: #{tpu_custom_call.1} parent=1 // pred_check_branch
      %465 = sbr.rel (0) target = $region29
    $region28: #{tpu_custom_call.1} parent=1 // pred_region
      %s467 = ssub.s32 256, 256
      %468 = vsyncadd [#allocation3], %s467
      %s469 = sshll.u32 [#allocation2], 4
      %s470 = int_to_ptr.vmem [resolvable:$true] %s469
      %475 = dma.vmem_to_hbm [thread:$0]  %s470, 256, %s6, [#allocation3], 128, 128, 8
    $region29: #{tpu_custom_call.1} parent=1 // pred_fallthru
      _
    // Predicated region
    $region30: #{tpu_custom_call.1} parent=1 // pred_check
      _
    $region31: #{tpu_custom_call.1} parent=1 // pred_check_branch
      %477 = sbr.rel (0) target = $region33
    $region32: #{tpu_custom_call.1} parent=1 // pred_region
      %478 = dma.done [#allocation3], 256
    $region33: #{tpu_custom_call.1} parent=1 // pred_fallthru
      _
    %479 = vsyncpa [#allocation3], 1

</llo_original>
